<compile_context>
chip_gen: v7x
topology: tpu7x:2x2x1
jax: 0.10.0
libtpu: 0.0.40
codegen_flags: <defaults>
</compile_context>

<pallas_src>
import numpy as np
import jax
import jax.numpy as jnp
from jax.experimental import pallas as pl
from jax.experimental.pallas import tpu as pltpu

BN_EPS = 1e-5


# ----------------------------------------------------------------------------
# Operator-matrix construction (setup glue, plain numpy, built once)
# ----------------------------------------------------------------------------
def _adaptive_avg_pool_matrix_1d(in_size: int, out_size: int) -> np.ndarray:
    """Row-stochastic matrix M (out, in) s.t. M @ v == AdaptiveAvgPool1d(v)."""
    mat = np.zeros((out_size, in_size), dtype=np.float32)
    for i in range(out_size):
        start = (i * in_size) // out_size
        end = -((-(i + 1) * in_size) // out_size)  # ceil((i+1)*in/out)
        mat[i, start:end] = 1.0 / float(end - start)
    return mat


def _bilinear_upsample_matrix_1d(out_size: int, in_size: int) -> np.ndarray:
    """Matrix U (out, in) reproducing F.interpolate bilinear, align_corners=False."""
    mat = np.zeros((out_size, in_size), dtype=np.float32)
    scale = in_size / out_size
    for d in range(out_size):
        src = scale * (d + 0.5) - 0.5
        if src < 0.0:
            src = 0.0
        i0 = int(np.floor(src))
        i0 = min(i0, in_size - 1)
        i1 = min(i0 + 1, in_size - 1)
        frac = src - i0
        mat[d, i0] += 1.0 - frac
        mat[d, i1] += frac
    return mat


def make_pool_matrix(H: int, W: int, size: int) -> np.ndarray:   # (S^2, HW)
    return np.kron(_adaptive_avg_pool_matrix_1d(H, size),
                   _adaptive_avg_pool_matrix_1d(W, size))


def make_upsample_matrix(H: int, W: int, size: int) -> np.ndarray:  # (HW, S^2)
    return np.kron(_bilinear_upsample_matrix_1d(H, size),
                   _bilinear_upsample_matrix_1d(W, size))


def build_ppm_operators(H, W, pool_sizes, params, in_channels, model_size,
                        pad_granule=64):
    """Stacked / BN-folded / padded operator tensors for the fused kernel.

    Returns (poolT, upT, weT, biasf, mask), all f32:
      poolT (HW,  S2p) : stacked adaptive-avg-pool operator (transposed),
                         bin columns zero-padded from S2t up to S2p.
      upT   (S2p, HW)  : stacked bilinear-upsample operator (transposed),
                         padded bin rows are zero.
      weT   (kM,  C)   : BN-folded 1x1-conv weights, branch rows only.
      biasf (kM,  S2p) : BN-folded bias, pre-broadcast full-width (lane-dense).
      mask  (kM,  S2p) : 0/1 block mask selecting each branch's own pooled
                         bins (kills cross-branch terms and padded bins).
    """
    C, M, k = in_channels, model_size, len(pool_sizes)
    kM = k * M
    s2 = [s * s for s in pool_sizes]
    S2t = sum(s2)
    S2p = ((S2t + pad_granule - 1) // pad_granule) * pad_granule   # 50 -> 64

    pool_all = np.zeros((S2p, H * W), np.float32)
    up_all = np.zeros((H * W, S2p), np.float32)
    mask = np.zeros((kM, S2p), np.float32)
    off = 0
    for b, (size, nbins) in enumerate(zip(pool_sizes, s2)):
        pool_all[off:off + nbins, :] = make_pool_matrix(H, W, size)
        up_all[:, off:off + nbins] = make_upsample_matrix(H, W, size)
        mask[b * M:(b + 1) * M, off:off + nbins] = 1.0
        off += nbins

    # Fold eval-mode BatchNorm into the conv weight and a single bias.
    w_rows, b_rows = [], []
    for (w, gamma, beta, mean, var) in params:
        scale = gamma / jnp.sqrt(var + BN_EPS)          # (1, M)
        w_rows.append((w * scale).T)                    # (M, C)
        b_rows.append((beta - mean * scale).reshape(model_size, 1))   # (M, 1)
    weT = jnp.concatenate(w_rows, axis=0).astype(jnp.float32)         # (kM, C)
    bias = jnp.concatenate(b_rows, axis=0).astype(jnp.float32)        # (kM, 1)
    biasf = (bias * jnp.ones((1, S2p), jnp.float32))                  # (kM, S2p)

    return (jnp.asarray(pool_all.T),        # (HW, S2p)
            jnp.asarray(up_all.T),          # (S2p, HW)
            weT,
            biasf,
            jnp.asarray(mask))


# ----------------------------------------------------------------------------
# Fused Pallas kernel: all pyramid branches + concat, whole batch at once
# ----------------------------------------------------------------------------
def ppm_fused(x2, N, C, poolT, upT, weT, biasf, mask, tile_w=128):
    """x2: (N*C, HW) f32 -> (N, C + kM, HW) f32."""
    NC, HW = x2.shape
    S2p = poolT.shape[1]
    kM = weT.shape[0]
    Ct = C + kM
    # Lane-dense output tiles of width TW; grid over output tiles is the
    # "parallel" axis (megacore sharding on v7x).
    TW = tile_w if HW % tile_w == 0 else HW
    grid = (HW // TW,)

    def kernel(poolT_ref, weT_ref, biasf_ref, mask_ref,
               xf_ref, xt_ref, upT_ref, out_ref):
        # 1) Adaptive-avg-pool of every branch at once, batch flattened into
        #    the MXU row dim: (N*C, HW) @ (HW, S2p).
        pooled = jnp.dot(xf_ref[...], poolT_ref[...],
                         preferred_element_type=jnp.float32)          # (N*C, S2p)
        weTv = weT_ref[...]
        biasf = biasf_ref[...]
        maskv = mask_ref[...]
        # 2) Per-image 1x1 conv (BN folded), bias, ReLU, cross-branch mask.
        #    Short unrolled per-image loop (K=C is tiny); kM rows only.
        ys = []
        for n in range(N):
            pooled_n = pooled[n * C:(n + 1) * C, :]                   # (C, S2p)
            z_n = jnp.dot(weTv, pooled_n,
                          preferred_element_type=jnp.float32)         # (kM, S2p)
            ys.append(jnp.maximum(z_n + biasf, 0.0) * maskv)
        y_all = jnp.concatenate(ys, axis=0)                           # (N*kM, S2p)
        # 3) Bilinear upsample of this output tile, batch flattened into rows:
        #    (N*kM, S2p) @ (S2p, TW).
        up = jnp.dot(y_all, upT_ref[...],
                     preferred_element_type=jnp.float32)              # (N*kM, TW)
        # 4) Disjoint stores per image: branch rows, then the exact identity
        #    passthrough (no full-tile store + overwrite).
        for n in range(N):
            out_ref[n, C:, :] = up[n * kM:(n + 1) * kM, :]
            out_ref[n, :C, :] = xt_ref[n * C:(n + 1) * C, :]

    return pl.pallas_call(
        kernel,
        out_shape=jax.ShapeDtypeStruct((N, Ct, HW), jnp.float32),
        grid=grid,
        in_specs=[
            pl.BlockSpec((HW, S2p), lambda j: (0, 0)),    # poolT   (constant)
            pl.BlockSpec((kM, C), lambda j: (0, 0)),      # weT     (constant)
            pl.BlockSpec((kM, S2p), lambda j: (0, 0)),    # biasf   (constant)
            pl.BlockSpec((kM, S2p), lambda j: (0, 0)),    # mask    (constant)
            pl.BlockSpec((NC, HW), lambda j: (0, 0)),     # x, full (pooling)
            pl.BlockSpec((NC, TW), lambda j: (0, j)),     # x, tile (passthrough)
            pl.BlockSpec((S2p, TW), lambda j: (0, j)),    # upT tile
        ],
        out_specs=pl.BlockSpec((N, Ct, TW), lambda j: (0, 0, j)),
        compiler_params=pltpu.CompilerParams(
            dimension_semantics=("parallel",)),
    )(poolT, weT, biasf, mask, x2, x2, upT)


# ----------------------------------------------------------------------------
# Module wrapper
# ----------------------------------------------------------------------------
def init_ppm_params(key, in_channels, pool_sizes, model_size):
    params = []
    for _ in pool_sizes:
        key, k1, k2, k3, k4, k5 = jax.random.split(key, 6)
        w = jax.random.normal(k1, (in_channels, model_size), jnp.float32) * 0.1
        gamma = 1.0 + 0.1 * jax.random.normal(k2, (1, model_size), jnp.float32)
        beta = 0.1 * jax.random.normal(k3, (1, model_size), jnp.float32)
        mean = 0.1 * jax.random.normal(k4, (1, model_size), jnp.float32)
        var = 0.5 + jnp.abs(jax.random.normal(k5, (1, model_size), jnp.float32))
        params.append((w, gamma, beta, mean, var))
    return params


def pyramid_pooling_module(x_nchw, ops):
    """x: (N, C, H, W) -> (N, C + k*M, H, W). ops from build_ppm_operators."""
    poolT, upT, weT, biasf, mask = ops
    N, C, H, W = x_nchw.shape
    out = ppm_fused(x_nchw.reshape(N * C, H * W), N, C,
                    poolT, upT, weT, biasf, mask)
    return out.reshape(N, out.shape[1], H, W)


# Pure-JAX f32 reference (per-branch dense einsums) for validation.
def pyramid_pooling_module_ref(x_nchw, params, pool_sizes):
    N, C, H, W = x_nchw.shape
    x_flat = jnp.transpose(x_nchw, (0, 2, 3, 1)).reshape(N, H * W, C)
    outs = [x_flat]
    for (w, gamma, beta, mean, var), size in zip(params, pool_sizes):
        pool_mat = jnp.asarray(make_pool_matrix(H, W, size))
        up_mat = jnp.asarray(make_upsample_matrix(H, W, size))
        pooled = jnp.einsum('ph,nhc->npc', pool_mat, x_flat)
        y = jnp.einsum('npc,cm->npm', pooled, w)
        y = (y - mean) * (gamma / jnp.sqrt(var + BN_EPS)) + beta
        y = jnp.maximum(y, 0.0)
        outs.append(jnp.einsum('hp,npm->nhm', up_mat, y))
    cat = jnp.concatenate(outs, axis=-1)
    c_total = cat.shape[-1]
    return jnp.transpose(cat.reshape(N, H, W, c_total), (0, 3, 1, 2))


if __name__ == "__main__":
    batch, in_channels, H, W = 2, 4, 16, 16
    pool_sizes = (1, 2, 3, 6)
    model_size = 8

    key = jax.random.PRNGKey(0)
    key, kx = jax.random.split(key)
    x = jax.random.normal(kx, (batch, in_channels, H, W), jnp.float32)
    params = init_ppm_params(key, in_channels, pool_sizes, model_size)

    # Operators built once (hoisted out of the jitted forward).
    ops = build_ppm_operators(H, W, pool_sizes, params, in_channels, model_size)

    fwd = jax.jit(pyramid_pooling_module)
    out = jax.block_until_ready(fwd(x, ops))

    expected_channels = in_channels + len(pool_sizes) * model_size
    assert out.shape == (batch, expected_channels, H, W), out.shape

    ref = pyramid_pooling_module_ref(x, params, pool_sizes)
    # All-f32 pipeline now -> tight tolerances.
    np.testing.assert_allclose(np.asarray(out), np.asarray(ref),
                               rtol=1e-4, atol=1e-4)
    # Passthrough (identity) channels are a straight f32 copy -> bit-exact.
    np.testing.assert_array_equal(np.asarray(out[:, :in_channels]),
                                  np.asarray(x))
    print("KERNEL_OK")
</pallas_src>

<mosaic_0001>
module attributes {stable_mosaic.version = 11 : i64} {
  func.func @kernel(%arg0: i32, %arg1: memref<256x64xf32, #tpu.memory_space<vmem>>, %arg2: memref<32x4xf32, #tpu.memory_space<vmem>>, %arg3: memref<32x64xf32, #tpu.memory_space<vmem>>, %arg4: memref<32x64xf32, #tpu.memory_space<vmem>>, %arg5: memref<8x256xf32, #tpu.memory_space<vmem>>, %arg6: memref<8x128xf32, #tpu.memory_space<vmem>>, %arg7: memref<64x128xf32, #tpu.memory_space<vmem>>, %arg8: memref<2x36x128xf32, #tpu.memory_space<vmem>>) attributes {dimension_semantics = [#tpu.dimension_semantics<parallel>], iteration_bounds = array<i64: 2>, scalar_prefetch = 0 : i64, scratch_operands = 0 : i64, tpu.core_type = #tpu.core_type<tc>, window_params = [{pipeline_mode = #tpu.pipeline_mode<synchronous>, transform_indices = @transform_0, window_bounds = array<i64: 256, 64>}, {pipeline_mode = #tpu.pipeline_mode<synchronous>, transform_indices = @transform_1, window_bounds = array<i64: 32, 4>}, {pipeline_mode = #tpu.pipeline_mode<synchronous>, transform_indices = @transform_2, window_bounds = array<i64: 32, 64>}, {pipeline_mode = #tpu.pipeline_mode<synchronous>, transform_indices = @transform_3, window_bounds = array<i64: 32, 64>}, {pipeline_mode = #tpu.pipeline_mode<synchronous>, transform_indices = @transform_4, window_bounds = array<i64: 8, 256>}, {transform_indices = @transform_5, window_bounds = array<i64: 8, 128>}, {transform_indices = @transform_6, window_bounds = array<i64: 64, 128>}, {transform_indices = @transform_7, window_bounds = array<i64: 2, 36, 128>}]} {
    %c0 = arith.constant 0 : index
    %c0_0 = arith.constant 0 : index
    %0 = vector.load %arg5[%c0, %c0_0] : memref<8x256xf32, #tpu.memory_space<vmem>>, vector<8x256xf32>
    %c0_1 = arith.constant 0 : index
    %c0_2 = arith.constant 0 : index
    %1 = vector.load %arg1[%c0_1, %c0_2] : memref<256x64xf32, #tpu.memory_space<vmem>>, vector<256x64xf32>
    %cst = arith.constant dense<0.000000e+00> : vector<8x64xf32>
    %2 = tpu.matmul %0, %1, %cst {dimension_numbers = #tpu.dot_dimension_numbers<[1], [0], [0], [1], [0, 0, 1, 1], [], []>} : vector<8x256xf32>, vector<256x64xf32>, vector<8x64xf32> -> vector<8x64xf32>
    %c0_3 = arith.constant 0 : index
    %c0_4 = arith.constant 0 : index
    %3 = vector.load %arg2[%c0_3, %c0_4] : memref<32x4xf32, #tpu.memory_space<vmem>>, vector<32x4xf32>
    %c0_5 = arith.constant 0 : index
    %c0_6 = arith.constant 0 : index
    %4 = vector.load %arg3[%c0_5, %c0_6] : memref<32x64xf32, #tpu.memory_space<vmem>>, vector<32x64xf32>
    %c0_7 = arith.constant 0 : index
    %c0_8 = arith.constant 0 : index
    %5 = vector.load %arg4[%c0_7, %c0_8] : memref<32x64xf32, #tpu.memory_space<vmem>>, vector<32x64xf32>
    %6 = vector.extract_strided_slice %2 {offsets = [0, 0], sizes = [4, 64], strides = [1, 1]} : vector<8x64xf32> to vector<4x64xf32>
    %cst_9 = arith.constant dense<0.000000e+00> : vector<32x64xf32>
    %7 = tpu.matmul %3, %6, %cst_9 {dimension_numbers = #tpu.dot_dimension_numbers<[1], [0], [0], [1], [0, 0, 1, 1], [], []>} : vector<32x4xf32>, vector<4x64xf32>, vector<32x64xf32> -> vector<32x64xf32>
    %8 = arith.addf %7, %4 : vector<32x64xf32>
    %cst_10 = arith.constant 0.000000e+00 : f32
    %9 = vector.broadcast %cst_10 : f32 to vector<32x64xf32>
    %10 = arith.maximumf %8, %9 : vector<32x64xf32>
    %11 = arith.mulf %10, %5 : vector<32x64xf32>
    %12 = vector.extract_strided_slice %2 {offsets = [4, 0], sizes = [4, 64], strides = [1, 1]} : vector<8x64xf32> to vector<4x64xf32>
    %cst_11 = arith.constant dense<0.000000e+00> : vector<32x64xf32>
    %13 = tpu.matmul %3, %12, %cst_11 {dimension_numbers = #tpu.dot_dimension_numbers<[1], [0], [0], [1], [0, 0, 1, 1], [], []>} : vector<32x4xf32>, vector<4x64xf32>, vector<32x64xf32> -> vector<32x64xf32>
    %14 = arith.addf %13, %4 : vector<32x64xf32>
    %cst_12 = arith.constant 0.000000e+00 : f32
    %15 = vector.broadcast %cst_12 : f32 to vector<32x64xf32>
    %16 = arith.maximumf %14, %15 : vector<32x64xf32>
    %17 = arith.mulf %16, %5 : vector<32x64xf32>
    %18 = tpu.concatenate %11, %17 in 0 : vector<32x64xf32>, vector<32x64xf32> -> vector<64x64xf32>
    %c0_13 = arith.constant 0 : index
    %c0_14 = arith.constant 0 : index
    %19 = vector.load %arg7[%c0_13, %c0_14] : memref<64x128xf32, #tpu.memory_space<vmem>>, vector<64x128xf32>
    %cst_15 = arith.constant dense<0.000000e+00> : vector<64x128xf32>
    %20 = tpu.matmul %18, %19, %cst_15 {dimension_numbers = #tpu.dot_dimension_numbers<[1], [0], [0], [1], [0, 0, 1, 1], [], []>} : vector<64x64xf32>, vector<64x128xf32>, vector<64x128xf32> -> vector<64x128xf32>
    %21 = vector.extract_strided_slice %20 {offsets = [0, 0], sizes = [32, 128], strides = [1, 1]} : vector<64x128xf32> to vector<32x128xf32>
    %c0_16 = arith.constant 0 : index
    %c4 = arith.constant 4 : index
    %c0_17 = arith.constant 0 : index
    %22 = vector.load %arg8[%c0_16, %c4, %c0_17] : memref<2x36x128xf32, #tpu.memory_space<vmem>>, vector<1x32x128xf32>
    %23 = vector.shape_cast %22 : vector<1x32x128xf32> to vector<32x128xf32>
    %24 = vector.shape_cast %21 : vector<32x128xf32> to vector<1x32x128xf32>
    tpu.vector_store %arg8[%c0_16, %c4, %c0_17], %24 {strides = array<i32>} : memref<2x36x128xf32, #tpu.memory_space<vmem>>, vector<1x32x128xf32>,
    %c0_18 = arith.constant 0 : index
    %c0_19 = arith.constant 0 : index
    %25 = vector.load %arg6[%c0_18, %c0_19] : memref<8x128xf32, #tpu.memory_space<vmem>>, vector<4x128xf32>
    %c0_20 = arith.constant 0 : index
    %c0_21 = arith.constant 0 : index
    %c0_22 = arith.constant 0 : index
    %26 = vector.load %arg8[%c0_20, %c0_21, %c0_22] : memref<2x36x128xf32, #tpu.memory_space<vmem>>, vector<1x4x128xf32>
    %27 = vector.shape_cast %26 : vector<1x4x128xf32> to vector<4x128xf32>
    %28 = vector.shape_cast %25 : vector<4x128xf32> to vector<1x4x128xf32>
    tpu.vector_store %arg8[%c0_20, %c0_21, %c0_22], %28 {strides = array<i32>} : memref<2x36x128xf32, #tpu.memory_space<vmem>>, vector<1x4x128xf32>,
    %29 = vector.extract_strided_slice %20 {offsets = [32, 0], sizes = [32, 128], strides = [1, 1]} : vector<64x128xf32> to vector<32x128xf32>
    %c1 = arith.constant 1 : index
    %c4_23 = arith.constant 4 : index
    %c0_24 = arith.constant 0 : index
    %30 = vector.load %arg8[%c1, %c4_23, %c0_24] : memref<2x36x128xf32, #tpu.memory_space<vmem>>, vector<1x32x128xf32>
    %31 = vector.shape_cast %30 : vector<1x32x128xf32> to vector<32x128xf32>
    %32 = vector.shape_cast %29 : vector<32x128xf32> to vector<1x32x128xf32>
    tpu.vector_store %arg8[%c1, %c4_23, %c0_24], %32 {strides = array<i32>} : memref<2x36x128xf32, #tpu.memory_space<vmem>>, vector<1x32x128xf32>,
    %c4_25 = arith.constant 4 : index
    %c0_26 = arith.constant 0 : index
    %33 = vector.load %arg6[%c4_25, %c0_26] : memref<8x128xf32, #tpu.memory_space<vmem>>, vector<4x128xf32>
    %c1_27 = arith.constant 1 : index
    %c0_28 = arith.constant 0 : index
    %c0_29 = arith.constant 0 : index
    %34 = vector.load %arg8[%c1_27, %c0_28, %c0_29] : memref<2x36x128xf32, #tpu.memory_space<vmem>>, vector<1x4x128xf32>
    %35 = vector.shape_cast %34 : vector<1x4x128xf32> to vector<4x128xf32>
    %36 = vector.shape_cast %33 : vector<4x128xf32> to vector<1x4x128xf32>
    tpu.vector_store %arg8[%c1_27, %c0_28, %c0_29], %36 {strides = array<i32>} : memref<2x36x128xf32, #tpu.memory_space<vmem>>, vector<1x4x128xf32>,
    return
  }
  func.func @transform_0(%arg0: i32) -> (i32, i32) {
    %c0_i32 = arith.constant 0 : i32
    %c0_i32_0 = arith.constant 0 : i32
    %c0_i32_1 = arith.constant 0 : i32
    return %c0_i32, %c0_i32_0 : i32, i32
  }
  func.func @transform_1(%arg0: i32) -> (i32, i32) {
    %c0_i32 = arith.constant 0 : i32
    %c0_i32_0 = arith.constant 0 : i32
    %c0_i32_1 = arith.constant 0 : i32
    return %c0_i32, %c0_i32_0 : i32, i32
  }
  func.func @transform_2(%arg0: i32) -> (i32, i32) {
    %c0_i32 = arith.constant 0 : i32
    %c0_i32_0 = arith.constant 0 : i32
    %c0_i32_1 = arith.constant 0 : i32
    return %c0_i32, %c0_i32_0 : i32, i32
  }
  func.func @transform_3(%arg0: i32) -> (i32, i32) {
    %c0_i32 = arith.constant 0 : i32
    %c0_i32_0 = arith.constant 0 : i32
    %c0_i32_1 = arith.constant 0 : i32
    return %c0_i32, %c0_i32_0 : i32, i32
  }
  func.func @transform_4(%arg0: i32) -> (i32, i32) {
    %c0_i32 = arith.constant 0 : i32
    %c0_i32_0 = arith.constant 0 : i32
    %c0_i32_1 = arith.constant 0 : i32
    return %c0_i32, %c0_i32_0 : i32, i32
  }
  func.func @transform_5(%arg0: i32) -> (i32, i32) {
    %c0_i32 = arith.constant 0 : i32
    %c0_i32_0 = arith.constant 0 : i32
    return %c0_i32, %arg0 : i32, i32
  }
  func.func @transform_6(%arg0: i32) -> (i32, i32) {
    %c0_i32 = arith.constant 0 : i32
    %c0_i32_0 = arith.constant 0 : i32
    return %c0_i32, %arg0 : i32, i32
  }
  func.func @transform_7(%arg0: i32) -> (i32, i32, i32) {
    %c0_i32 = arith.constant 0 : i32
    %c0_i32_0 = arith.constant 0 : i32
    %c0_i32_1 = arith.constant 0 : i32
    return %c0_i32, %c0_i32_0, %arg0 : i32, i32, i32
  }
}

</mosaic_0001>

<llo_original>
// kernel: pyramid_pooling_module.1
$region0: #{pyramid_pooling_module.1}
  #allocation0 [shape = 'u32[]', space=smem, size = 0x4, offset = 0x4, fixed_abs, tag = 'smem constant byte address 0x4 - core index']
  #allocation1 [shape = 'u32[144,128]{1,0:T(1,128)}', space=vmem, size = 0x12000, scoped, tag = 'internal scratch']
  %s0 = inlined_call_operand.vmem [shape: f32[256,64], index: 0, kind: input, shape index: {}]
  %s1 = inlined_call_operand.vmem [shape: f32[32,4], index: 1, kind: input, shape index: {}]
  %s2 = inlined_call_operand.vmem [shape: f32[32,64], index: 2, kind: input, shape index: {}]
  %s3 = inlined_call_operand.vmem [shape: f32[32,64], index: 3, kind: input, shape index: {}]
  %s4 = inlined_call_operand.vmem [shape: f32[8,256], index: 4, kind: input, shape index: {}, may-alias: {4,5}]
  %s5 = inlined_call_operand.vmem [shape: f32[8,256], index: 5, kind: input, shape index: {}, may-alias: {4,5}]
  %s6 = inlined_call_operand.vmem [shape: f32[64,256], index: 6, kind: input, shape index: {}]
  %s7 = inlined_call_operand.vmem [shape: f32[2,36,256], index: 7, kind: output, shape index: {}]
  %s8 = sld [smem:[#allocation0]]
  $region133: #{pyramid_pooling_module.1} parent=0
    _
  %s10 = ssub.s32 1, %s8
  %s11 = scalar_select 0, %s10, %s8
  $region1: #{pyramid_pooling_module.1} parent=0
    #allocation2 [shape = 'u8[65536]{0}', space=vmem, size = 0x10000, scoped, tag = 'input window, operand 6']
    #allocation3 [shape = 'u8[81920]{0}', space=vmem, size = 0x14000, scoped, tag = 'output window, operand 0']
    loop: start=0, step=1, limit=4
    $region2: #{pyramid_pooling_module.1} parent=1 // loop_pre_header
      _
    $region3: #{pyramid_pooling_module.1} parent=1 // loop_header
      %s13 = sphi 0, %s17
      %p14 = scmp.ge.s32.totalorder %s13, 4
      %s21 = sphi 0, %s21
      %s23 = sphi 0, %s21
      %s24 = sphi 0, %s23
      %s38 = sphi 0, %s24
      %s42 = sphi 0, %s42
      %s44 = sphi 0, %s42
      %s45 = sphi 0, %s44
      %s59 = sphi 0, %s45
      %s63 = sphi 0, %s63
      %s65 = sphi 0, %s63
      %s66 = sphi 0, %s65
      %s80 = sphi 0, %s66
      %s84 = sphi 0, %s84
      %s86 = sphi 0, %s84
      %s87 = sphi 0, %s86
      %s101 = sphi 0, %s87
      %s105 = sphi 0, %s105
      %s107 = sphi 0, %s105
      %s108 = sphi 0, %s107
      %s122 = sphi 0, %s108
      %s128 = sphi 0, %s130
      %s131 = sphi 0, %s128
      %s132 = sphi 0, %s131
      %s148 = sphi 0, %s132
      %s154 = sphi 0, %s156
      %s157 = sphi 0, %s154
      %s158 = sphi 0, %s157
      %s174 = sphi 0, %s158
      %s180 = sphi 0, %s182
      %s183 = sphi 0, %s180
      %s184 = sphi 0, %s183
      %s200 = sphi 0, %s184
    $region4: #{pyramid_pooling_module.1} parent=1 // loop_header_branch
      %16 = sbr.rel (%p14) target = $region8
    $region5: #{pyramid_pooling_module.1} parent=1 // loop_body
      %s18 = ssub.s32 %s13, 1
      %s19 = ssub.s32 %s13, 2
      %s20 = sadd.s32 %s13, 1
      %s22 = sadd.s32 %s21, 1
      %p25 = scmp.eq.s32.totalorder %s13, 1
      %p26 = scmp.ne.s32.totalorder %s21, %s23
      %p27 = scmp.eq.s32.totalorder %s13, 0
      %p28 = por %p26, %p27
      %p29 = scmp.ne.s32.totalorder %s21, %s23
      %p30 = scmp.eq.s32.totalorder %s18, 1
      %p31 = por %p29, %p30
      %p32 = scmp.ne.s32.totalorder %s23, %s24
      %p33 = scmp.eq.s32.totalorder %s18, 0
      %p34 = por %p32, %p33
      %p35 = scmp.ne.s32.totalorder %s23, %s24
      %p36 = scmp.eq.s32.totalorder %s19, 1
      %p37 = por %p35, %p36
      %p39 = scmp.ne.s32.totalorder %s24, %s38
      %p40 = scmp.eq.s32.totalorder %s19, 0
      %p41 = por %p39, %p40
      %s43 = sadd.s32 %s42, 1
      %p46 = scmp.eq.s32.totalorder %s13, 1
      %p47 = scmp.ne.s32.totalorder %s42, %s44
      %p48 = scmp.eq.s32.totalorder %s13, 0
      %p49 = por %p47, %p48
      %p50 = scmp.ne.s32.totalorder %s42, %s44
      %p51 = scmp.eq.s32.totalorder %s18, 1
      %p52 = por %p50, %p51
      %p53 = scmp.ne.s32.totalorder %s44, %s45
      %p54 = scmp.eq.s32.totalorder %s18, 0
      %p55 = por %p53, %p54
      %p56 = scmp.ne.s32.totalorder %s44, %s45
      %p57 = scmp.eq.s32.totalorder %s19, 1
      %p58 = por %p56, %p57
      %p60 = scmp.ne.s32.totalorder %s45, %s59
      %p61 = scmp.eq.s32.totalorder %s19, 0
      %p62 = por %p60, %p61
      %s64 = sadd.s32 %s63, 1
      %p67 = scmp.eq.s32.totalorder %s13, 1
      %p68 = scmp.ne.s32.totalorder %s63, %s65
      %p69 = scmp.eq.s32.totalorder %s13, 0
      %p70 = por %p68, %p69
      %p71 = scmp.ne.s32.totalorder %s63, %s65
      %p72 = scmp.eq.s32.totalorder %s18, 1
      %p73 = por %p71, %p72
      %p74 = scmp.ne.s32.totalorder %s65, %s66
      %p75 = scmp.eq.s32.totalorder %s18, 0
      %p76 = por %p74, %p75
      %p77 = scmp.ne.s32.totalorder %s65, %s66
      %p78 = scmp.eq.s32.totalorder %s19, 1
      %p79 = por %p77, %p78
      %p81 = scmp.ne.s32.totalorder %s66, %s80
      %p82 = scmp.eq.s32.totalorder %s19, 0
      %p83 = por %p81, %p82
      %s85 = sadd.s32 %s84, 1
      %p88 = scmp.eq.s32.totalorder %s13, 1
      %p89 = scmp.ne.s32.totalorder %s84, %s86
      %p90 = scmp.eq.s32.totalorder %s13, 0
      %p91 = por %p89, %p90
      %p92 = scmp.ne.s32.totalorder %s84, %s86
      %p93 = scmp.eq.s32.totalorder %s18, 1
      %p94 = por %p92, %p93
      %p95 = scmp.ne.s32.totalorder %s86, %s87
      %p96 = scmp.eq.s32.totalorder %s18, 0
      %p97 = por %p95, %p96
      %p98 = scmp.ne.s32.totalorder %s86, %s87
      %p99 = scmp.eq.s32.totalorder %s19, 1
      %p100 = por %p98, %p99
      %p102 = scmp.ne.s32.totalorder %s87, %s101
      %p103 = scmp.eq.s32.totalorder %s19, 0
      %p104 = por %p102, %p103
      %s106 = sadd.s32 %s105, 1
      %p109 = scmp.eq.s32.totalorder %s13, 1
      %p110 = scmp.ne.s32.totalorder %s105, %s107
      %p111 = scmp.eq.s32.totalorder %s13, 0
      %p112 = por %p110, %p111
      %p113 = scmp.ne.s32.totalorder %s105, %s107
      %p114 = scmp.eq.s32.totalorder %s18, 1
      %p115 = por %p113, %p114
      %p116 = scmp.ne.s32.totalorder %s107, %s108
      %p117 = scmp.eq.s32.totalorder %s18, 0
      %p118 = por %p116, %p117
      %p119 = scmp.ne.s32.totalorder %s107, %s108
      %p120 = scmp.eq.s32.totalorder %s19, 1
      %p121 = por %p119, %p120
      %p123 = scmp.ne.s32.totalorder %s108, %s122
      %p124 = scmp.eq.s32.totalorder %s19, 0
      %p125 = por %p123, %p124
      %s126 = ssub.s32 %s13, %s20
      %p127 = scmp.eq.s32.totalorder %s126, 0
      %s129 = sadd.s32 %s128, 1
      %s130 = scalar_select %p127, %s128, %s129
      %p133 = pneg %p127
      %p134 = scmp.eq.s32.totalorder %s13, 1
      %p135 = por %p133, %p134
      %p136 = scmp.ne.s32.totalorder %s128, %s131
      %p137 = scmp.eq.s32.totalorder %s13, 0
      %p138 = por %p136, %p137
      %p139 = scmp.ne.s32.totalorder %s128, %s131
      %p140 = scmp.eq.s32.totalorder %s18, 1
      %p141 = por %p139, %p140
      %p142 = scmp.ne.s32.totalorder %s131, %s132
      %p143 = scmp.eq.s32.totalorder %s18, 0
      %p144 = por %p142, %p143
      %p145 = scmp.ne.s32.totalorder %s131, %s132
      %p146 = scmp.eq.s32.totalorder %s19, 1
      %p147 = por %p145, %p146
      %p149 = scmp.ne.s32.totalorder %s132, %s148
      %p150 = scmp.eq.s32.totalorder %s19, 0
      %p151 = por %p149, %p150
      %s152 = ssub.s32 %s13, %s20
      %p153 = scmp.eq.s32.totalorder %s152, 0
      %s155 = sadd.s32 %s154, 1
      %s156 = scalar_select %p153, %s154, %s155
      %p159 = pneg %p153
      %p160 = scmp.eq.s32.totalorder %s13, 1
      %p161 = por %p159, %p160
      %p162 = scmp.ne.s32.totalorder %s154, %s157
      %p163 = scmp.eq.s32.totalorder %s13, 0
      %p164 = por %p162, %p163
      %p165 = scmp.ne.s32.totalorder %s154, %s157
      %p166 = scmp.eq.s32.totalorder %s18, 1
      %p167 = por %p165, %p166
      %p168 = scmp.ne.s32.totalorder %s157, %s158
      %p169 = scmp.eq.s32.totalorder %s18, 0
      %p170 = por %p168, %p169
      %p171 = scmp.ne.s32.totalorder %s157, %s158
      %p172 = scmp.eq.s32.totalorder %s19, 1
      %p173 = por %p171, %p172
      %p175 = scmp.ne.s32.totalorder %s158, %s174
      %p176 = scmp.eq.s32.totalorder %s19, 0
      %p177 = por %p175, %p176
      %s178 = ssub.s32 %s13, %s20
      %p179 = scmp.eq.s32.totalorder %s178, 0
      %s181 = sadd.s32 %s180, 1
      %s182 = scalar_select %p179, %s180, %s181
      %p185 = pneg %p179
      %p186 = scmp.eq.s32.totalorder %s13, 1
      %p187 = por %p185, %p186
      %p188 = scmp.ne.s32.totalorder %s180, %s183
      %p189 = scmp.eq.s32.totalorder %s13, 0
      %p190 = por %p188, %p189
      %p191 = scmp.ne.s32.totalorder %s180, %s183
      %p192 = scmp.eq.s32.totalorder %s18, 1
      %p193 = por %p191, %p192
      %p194 = scmp.ne.s32.totalorder %s183, %s184
      %p195 = scmp.eq.s32.totalorder %s18, 0
      %p196 = por %p194, %p195
      %p197 = scmp.ne.s32.totalorder %s183, %s184
      %p198 = scmp.eq.s32.totalorder %s19, 1
      %p199 = por %p197, %p198
      %p201 = scmp.ne.s32.totalorder %s184, %s200
      %p202 = scmp.eq.s32.totalorder %s19, 0
      %p203 = por %p201, %p202
      %p204 = scmp.le.s32.totalorder 1, %s13
      %p205 = scmp.lt.s32.totalorder %s13, 3
      %p206 = pnand %p204, %p205
      %p207 = pneg %p206
      // Predicated region
      $region9: #{pyramid_pooling_module.1} parent=5 // pred_check
        _
      $region10: #{pyramid_pooling_module.1} parent=5 // pred_check_branch
        %209 = sbr.rel (%p206) target = $region12
      $region11: #{pyramid_pooling_module.1} parent=5 // pred_region
        %s210 = ssub.s32 %s13, 1
        // Predicated region
        $region13: #{pyramid_pooling_module.1} parent=11 // pred_check
          %p211 = pneg %p34
        $region14: #{pyramid_pooling_module.1} parent=11 // pred_check_branch
          %213 = sbr.rel (%p211) target = $region16
        $region15: #{pyramid_pooling_module.1} parent=11 // pred_region
          _
        $region16: #{pyramid_pooling_module.1} parent=11 // pred_fallthru
          _
        // Predicated region
        $region17: #{pyramid_pooling_module.1} parent=11 // pred_check
          %p214 = pneg %p55
        $region18: #{pyramid_pooling_module.1} parent=11 // pred_check_branch
          %216 = sbr.rel (%p214) target = $region20
        $region19: #{pyramid_pooling_module.1} parent=11 // pred_region
          _
        $region20: #{pyramid_pooling_module.1} parent=11 // pred_fallthru
          _
        // Predicated region
        $region21: #{pyramid_pooling_module.1} parent=11 // pred_check
          %p217 = pneg %p76
        $region22: #{pyramid_pooling_module.1} parent=11 // pred_check_branch
          %219 = sbr.rel (%p217) target = $region24
        $region23: #{pyramid_pooling_module.1} parent=11 // pred_region
          _
        $region24: #{pyramid_pooling_module.1} parent=11 // pred_fallthru
          _
        // Predicated region
        $region25: #{pyramid_pooling_module.1} parent=11 // pred_check
          %p220 = pneg %p97
        $region26: #{pyramid_pooling_module.1} parent=11 // pred_check_branch
          %222 = sbr.rel (%p220) target = $region28
        $region27: #{pyramid_pooling_module.1} parent=11 // pred_region
          _
        $region28: #{pyramid_pooling_module.1} parent=11 // pred_fallthru
          _
        // Predicated region
        $region29: #{pyramid_pooling_module.1} parent=11 // pred_check
          %p223 = pneg %p118
        $region30: #{pyramid_pooling_module.1} parent=11 // pred_check_branch
          %225 = sbr.rel (%p223) target = $region32
        $region31: #{pyramid_pooling_module.1} parent=11 // pred_region
          _
        $region32: #{pyramid_pooling_module.1} parent=11 // pred_fallthru
          _
      $region12: #{pyramid_pooling_module.1} parent=5 // pred_fallthru
        _
      %p226 = scmp.lt.s32.totalorder %s13, 2
      // Predicated region
      $region33: #{pyramid_pooling_module.1} parent=5 // pred_check
        %p227 = pneg %p226
      $region34: #{pyramid_pooling_module.1} parent=5 // pred_check_branch
        %229 = sbr.rel (%p227) target = $region36
      $region35: #{pyramid_pooling_module.1} parent=5 // pred_region
        // Predicated region
        $region37: #{pyramid_pooling_module.1} parent=35 // pred_check
          %p230 = pneg %p138
        $region38: #{pyramid_pooling_module.1} parent=35 // pred_check_branch
          %232 = sbr.rel (%p230) target = $region40
        $region39: #{pyramid_pooling_module.1} parent=35 // pred_region
          %p233 = scmp.lt.s32.totalorder %s13, 1
          %s234 = scalar_select %p233, %s13, 1
          %s235 = smul.addr %s234, 8
          %s236 = scalar_lea.vmem %s5, %s235
        $region40: #{pyramid_pooling_module.1} parent=35 // pred_fallthru
          _
        // Predicated region
        $region41: #{pyramid_pooling_module.1} parent=35 // pred_check
          %p237 = pneg %p164
        $region42: #{pyramid_pooling_module.1} parent=35 // pred_check_branch
          %239 = sbr.rel (%p237) target = $region44
        $region43: #{pyramid_pooling_module.1} parent=35 // pred_region
          %s240 = sand.u32 %s154, 1
          %s241 = sand.u32 %s154, 1
          %s242 = smul.addr %s241, 64
          %s243 = scalar_lea.vmem [#allocation2], %s242
          %s244 = smul.addr %s13, 8
          %s245 = scalar_lea.vmem %s6, %s244
          // Predicated region
          $region45: #{pyramid_pooling_module.1} parent=43 // pred_check
            _
          $region46: #{pyramid_pooling_module.1} parent=43 // pred_check_branch
            %247 = sbr.rel (0) target = $region48
          $region47: #{pyramid_pooling_module.1} parent=43 // pred_region
            // Predicated region
            $region49: #{pyramid_pooling_module.1} parent=47 // pred_check
              _
            $region50: #{pyramid_pooling_module.1} parent=47 // pred_check_branch
              %249 = sbr.rel (0) target = $region52
            $region51: #{pyramid_pooling_module.1} parent=47 // pred_region
              // Predicated region
              $region64: #{pyramid_pooling_module.1} parent=51 // pred_check
                _
              $region65: #{pyramid_pooling_module.1} parent=51 // pred_check_branch
                %278 = sbr.rel (0) target = $region67
              $region66: #{pyramid_pooling_module.1} parent=51 // pred_region
                loop: start=0, step=1, limit=1
                $region68: #{pyramid_pooling_module.1} parent=66 // loop_pre_header
                  _
                $region69: #{pyramid_pooling_module.1} parent=66 // loop_header
                  %s280 = sphi 0, %s284
                  %p281 = scmp.ge.s32.totalorder %s280, 1
                  %s285 = sphi %s245, %s245
                  %s286 = sphi %s243, %s243
                $region70: #{pyramid_pooling_module.1} parent=66 // loop_header_branch
                  %283 = sbr.rel (%p281) target = $region74
                $region71: #{pyramid_pooling_module.1} parent=66 // loop_body
                  %v287 = vld [vmem:[%s285] sm:$0xff]
                  %288 = vst [vmem:[%s286] sm:$0xff] %v287
                  %v289 = vld [vmem:[%s285 + $0x10] sm:$0xff]
                  %290 = vst [vmem:[%s286 + $0x8] sm:$0xff] %v289
                  %v291 = vld [vmem:[%s285 + $0x20] sm:$0xff]
                  %292 = vst [vmem:[%s286 + $0x10] sm:$0xff] %v291
                  %v293 = vld [vmem:[%s285 + $0x30] sm:$0xff]
                  %294 = vst [vmem:[%s286 + $0x18] sm:$0xff] %v293
                  %v295 = vld [vmem:[%s285 + $0x40] sm:$0xff]
                  %296 = vst [vmem:[%s286 + $0x20] sm:$0xff] %v295
                  %v297 = vld [vmem:[%s285 + $0x50] sm:$0xff]
                  %298 = vst [vmem:[%s286 + $0x28] sm:$0xff] %v297
                  %v299 = vld [vmem:[%s285 + $0x60] sm:$0xff]
                  %300 = vst [vmem:[%s286 + $0x30] sm:$0xff] %v299
                  %v301 = vld [vmem:[%s285 + $0x70] sm:$0xff]
                  %302 = vst [vmem:[%s286 + $0x38] sm:$0xff] %v301
                $region72: #{pyramid_pooling_module.1} parent=66 // loop_footer
                  %s284 = sadd.s32 1, %s280
                $region73: #{pyramid_pooling_module.1} parent=66 // loop_footer_branch
                  %279 = sbr.rel target = $region69
                $region74: #{pyramid_pooling_module.1} parent=66 // loop_exit
                  _
              $region67: #{pyramid_pooling_module.1} parent=51 // pred_fallthru
                _
              // Predicated region
              $region75: #{pyramid_pooling_module.1} parent=51 // pred_check
                _
              $region76: #{pyramid_pooling_module.1} parent=51 // pred_check_branch
                %304 = sbr.rel target = $region78
              $region77: #{pyramid_pooling_module.1} parent=51 // pred_region
                _
              $region78: #{pyramid_pooling_module.1} parent=51 // pred_fallthru
                _
            $region52: #{pyramid_pooling_module.1} parent=47 // pred_fallthru
              _
            // Predicated region
            $region53: #{pyramid_pooling_module.1} parent=47 // pred_check
              _
            $region54: #{pyramid_pooling_module.1} parent=47 // pred_check_branch
              %251 = sbr.rel target = $region56
            $region55: #{pyramid_pooling_module.1} parent=47 // pred_region
              loop: start=0, step=1, limit=1
              $region57: #{pyramid_pooling_module.1} parent=55 // loop_pre_header
                _
              $region58: #{pyramid_pooling_module.1} parent=55 // loop_header
                %s254 = sphi 0, %s258
                %p255 = scmp.ge.s32.totalorder %s254, 1
                %s259 = sphi %s245, %s245
                %s260 = sphi %s243, %s243
              $region59: #{pyramid_pooling_module.1} parent=55 // loop_header_branch
                %257 = sbr.rel (%p255) target = $region63
              $region60: #{pyramid_pooling_module.1} parent=55 // loop_body
                %v261 = vld [vmem:[%s259] sm:$0xff]
                %262 = vst [vmem:[%s260] sm:$0xff] %v261
                %v263 = vld [vmem:[%s259 + $0x10] sm:$0xff]
                %264 = vst [vmem:[%s260 + $0x8] sm:$0xff] %v263
                %v265 = vld [vmem:[%s259 + $0x20] sm:$0xff]
                %266 = vst [vmem:[%s260 + $0x10] sm:$0xff] %v265
                %v267 = vld [vmem:[%s259 + $0x30] sm:$0xff]
                %268 = vst [vmem:[%s260 + $0x18] sm:$0xff] %v267
                %v269 = vld [vmem:[%s259 + $0x40] sm:$0xff]
                %270 = vst [vmem:[%s260 + $0x20] sm:$0xff] %v269
                %v271 = vld [vmem:[%s259 + $0x50] sm:$0xff]
                %272 = vst [vmem:[%s260 + $0x28] sm:$0xff] %v271
                %v273 = vld [vmem:[%s259 + $0x60] sm:$0xff]
                %274 = vst [vmem:[%s260 + $0x30] sm:$0xff] %v273
                %v275 = vld [vmem:[%s259 + $0x70] sm:$0xff]
                %276 = vst [vmem:[%s260 + $0x38] sm:$0xff] %v275
              $region61: #{pyramid_pooling_module.1} parent=55 // loop_footer
                %s258 = sadd.s32 1, %s254
              $region62: #{pyramid_pooling_module.1} parent=55 // loop_footer_branch
                %253 = sbr.rel target = $region58
              $region63: #{pyramid_pooling_module.1} parent=55 // loop_exit
                _
            $region56: #{pyramid_pooling_module.1} parent=47 // pred_fallthru
              _
          $region48: #{pyramid_pooling_module.1} parent=43 // pred_fallthru
            _
          %305 = vnop
        $region44: #{pyramid_pooling_module.1} parent=35 // pred_fallthru
          _
      $region36: #{pyramid_pooling_module.1} parent=5 // pred_fallthru
        _
      %p306 = scmp.le.s32.totalorder 1, %s13
      %p307 = scmp.lt.s32.totalorder %s13, 3
      %p308 = pnand %p306, %p307
      %p309 = pneg %p308
      // Predicated region
      $region79: #{pyramid_pooling_module.1} parent=5 // pred_check
        _
      $region80: #{pyramid_pooling_module.1} parent=5 // pred_check_branch
        %311 = sbr.rel (%p308) target = $region82
      $region81: #{pyramid_pooling_module.1} parent=5 // pred_region
        %s312 = ssub.s32 %s13, 1
        %s313 = sand.u32 %s157, 1
        %s314 = sand.u32 %s157, 1
        %s315 = smul.addr %s314, 64
        %s316 = scalar_lea.vmem [#allocation2], %s315
        // Predicated region
        $region83: #{pyramid_pooling_module.1} parent=81 // pred_check
          %p317 = pneg %p170
        $region84: #{pyramid_pooling_module.1} parent=81 // pred_check_branch
          %319 = sbr.rel (%p317) target = $region86
        $region85: #{pyramid_pooling_module.1} parent=81 // pred_region
          _
        $region86: #{pyramid_pooling_module.1} parent=81 // pred_fallthru
          _
        %p320 = pneg %p34
        %p321 = pneg %p31
        %p322 = pneg %p55
        %p323 = pneg %p52
        %p324 = pneg %p76
        %p325 = pneg %p73
        %p326 = pneg %p97
        %p327 = pneg %p94
        %p328 = pneg %p118
        %p329 = pneg %p115
        %p330 = scmp.lt.s32.totalorder %s18, 1
        %s331 = scalar_select %p330, %s18, 1
        %s332 = smul.addr %s331, 8
        %s333 = scalar_lea.vmem %s5, %s332
        %p334 = pneg %p144
        %p335 = pneg %p141
        %s336 = sand.u32 %s157, 1
        %s337 = sand.u32 %s157, 1
        %s338 = smul.addr %s337, 64
        %s339 = scalar_lea.vmem [#allocation2], %s338
        %p340 = pneg %p170
        %p341 = pneg %p167
        %p342 = pneg %p196
        %p343 = pneg %p193
        %s344 = sand.u32 %s183, 1
        %s345 = sand.u32 %s183, 1
        %s346 = smul.addr %s345, 80
        %s347 = scalar_lea.vmem [#allocation3], %s346
        %p348 = scmp.lt.s32.totalorder %s18, 1
        %s349 = scalar_select %p348, %s18, 1
        %s350 = smul.addr %s349, 8
        %s351 = scalar_lea.vmem %s5, %s350
        %v352 = vld [vmem:[%s4] sm:$0xff]
        %v353 = vld [vmem:[%s4 + $0x8] sm:$0xff]
        %v354 = vld [vmem:[%s0] sm:$0xff]
        %v355 = vld [vmem:[%s0 + $0x8] sm:$0xff]
        %v356 = vld [vmem:[%s0 + $0x10] sm:$0xff]
        %v357 = vld [vmem:[%s0 + $0x18] sm:$0xff]
        %v358 = vld [vmem:[%s0 + $0x20] sm:$0xff]
        %v359 = vld [vmem:[%s0 + $0x28] sm:$0xff]
        %v360 = vld [vmem:[%s0 + $0x30] sm:$0xff]
        %v361 = vld [vmem:[%s0 + $0x38] sm:$0xff]
        %v362 = vld [vmem:[%s0 + $0x40] sm:$0xff]
        %v363 = vld [vmem:[%s0 + $0x48] sm:$0xff]
        %v364 = vld [vmem:[%s0 + $0x50] sm:$0xff]
        %v365 = vld [vmem:[%s0 + $0x58] sm:$0xff]
        %v366 = vld [vmem:[%s0 + $0x60] sm:$0xff]
        %v367 = vld [vmem:[%s0 + $0x68] sm:$0xff]
        %v368 = vld [vmem:[%s0 + $0x70] sm:$0xff]
        %v369 = vld [vmem:[%s0 + $0x78] sm:$0xff]
        %v370 = vld [vmem:[%s0 + $0x80] sm:$0xff]
        %v371 = vld [vmem:[%s0 + $0x88] sm:$0xff]
        %v372 = vld [vmem:[%s0 + $0x90] sm:$0xff]
        %v373 = vld [vmem:[%s0 + $0x98] sm:$0xff]
        %v374 = vld [vmem:[%s0 + $0xa0] sm:$0xff]
        %v375 = vld [vmem:[%s0 + $0xa8] sm:$0xff]
        %v376 = vld [vmem:[%s0 + $0xb0] sm:$0xff]
        %v377 = vld [vmem:[%s0 + $0xb8] sm:$0xff]
        %v378 = vld [vmem:[%s0 + $0xc0] sm:$0xff]
        %v379 = vld [vmem:[%s0 + $0xc8] sm:$0xff]
        %v380 = vld [vmem:[%s0 + $0xd0] sm:$0xff]
        %v381 = vld [vmem:[%s0 + $0xd8] sm:$0xff]
        %v382 = vld [vmem:[%s0 + $0xe0] sm:$0xff]
        %v383 = vld [vmem:[%s0 + $0xe8] sm:$0xff]
        %v384 = vld [vmem:[%s0 + $0xf0] sm:$0xff]
        %v385 = vld [vmem:[%s0 + $0xf8] sm:$0xff]
        %386 = vmatprep.subr.mxu0 0.0
        %387 = vmatpush1.msra.mxu0 %v354
        %388 = vmatprep.subr.mxu0 0.0
        %389 = vmatpush1.msra.mxu0 %v355
        %390 = vmatprep.subr.mxu0 0.0
        %391 = vmatpush1.msra.mxu0 %v356
        %392 = vmatprep.subr.mxu0 0.0
        %393 = vmatpush1.msra.mxu0 %v357
        %394 = vmatprep.subr.mxu0 0.0
        %395 = vmatpush1.msra.mxu0 %v358
        %396 = vmatprep.subr.mxu0 0.0
        %397 = vmatpush1.msra.mxu0 %v359
        %398 = vmatprep.subr.mxu0 0.0
        %399 = vmatpush1.msra.mxu0 %v360
        %400 = vmatprep.subr.mxu0 0.0
        %401 = vmatpush1.msra.mxu0 %v361
        %402 = vmatprep.subr.mxu0 0.0
        %403 = vmatpush1.msra.mxu0 %v362
        %404 = vmatprep.subr.mxu0 0.0
        %405 = vmatpush1.msra.mxu0 %v363
        %406 = vmatprep.subr.mxu0 0.0
        %407 = vmatpush1.msra.mxu0 %v364
        %408 = vmatprep.subr.mxu0 0.0
        %409 = vmatpush1.msra.mxu0 %v365
        %410 = vmatprep.subr.mxu0 0.0
        %411 = vmatpush1.msra.mxu0 %v366
        %412 = vmatprep.subr.mxu0 0.0
        %413 = vmatpush1.msra.mxu0 %v367
        %414 = vmatprep.subr.mxu0 0.0
        %415 = vmatpush1.msra.mxu0 %v368
        %416 = vmatprep.subr.mxu0 0.0
        %417 = vmatpush1.msra.mxu0 %v369
        %418 = vmatprep.subr.mxu0 0.0
        %419 = vmatpush1.msra.mxu0 %v370
        %420 = vmatprep.subr.mxu0 0.0
        %421 = vmatpush1.msra.mxu0 %v371
        %422 = vmatprep.subr.mxu0 0.0
        %423 = vmatpush1.msra.mxu0 %v372
        %424 = vmatprep.subr.mxu0 0.0
        %425 = vmatpush1.msra.mxu0 %v373
        %426 = vmatprep.subr.mxu0 0.0
        %427 = vmatpush1.msra.mxu0 %v374
        %428 = vmatprep.subr.mxu0 0.0
        %429 = vmatpush1.msra.mxu0 %v375
        %430 = vmatprep.subr.mxu0 0.0
        %431 = vmatpush1.msra.mxu0 %v376
        %432 = vmatprep.subr.mxu0 0.0
        %433 = vmatpush1.msra.mxu0 %v377
        %434 = vmatprep.subr.mxu0 0.0
        %435 = vmatpush1.msra.mxu0 %v378
        %436 = vmatprep.subr.mxu0 0.0
        %437 = vmatpush1.msra.mxu0 %v379
        %438 = vmatprep.subr.mxu0 0.0
        %439 = vmatpush1.msra.mxu0 %v380
        %440 = vmatprep.subr.mxu0 0.0
        %441 = vmatpush1.msra.mxu0 %v381
        %442 = vmatprep.subr.mxu0 0.0
        %443 = vmatpush1.msra.mxu0 %v382
        %444 = vmatprep.subr.mxu0 0.0
        %445 = vmatpush1.msra.mxu0 %v383
        %446 = vmatprep.subr.mxu0 0.0
        %447 = vmatpush1.msra.mxu0 %v384
        %448 = vmatprep.subr.mxu0 0.0
        %449 = vmatpush1.msra.mxu0 %v385
        %450 = vmatprep.mubr.f32.mxu0 %v353
        %451 = vmatmul.mubr.f32.gmra.mrb[0].mxu0 %v352
        %v452 = vpop.f32.mrb[0].mxu0
        %v453 = vadd.f32 0.0, %v452
        %v454 = vpop.f32.mrb[0].mxu0
        %455 = vdwg.mxu0
        %v456 = vld [vmem:[%s1] sm:$0xff]
        %v457 = vld [vmem:[%s1 + $0x8] sm:$0xff]
        %v458 = vld [vmem:[%s1 + $0x10] sm:$0xff]
        %v459 = vld [vmem:[%s1 + $0x18] sm:$0xff]
        %v460 = vld [vmem:[%s2] sm:$0xff]
        %v461 = vld [vmem:[%s2 + $0x8] sm:$0xff]
        %v462 = vld [vmem:[%s2 + $0x10] sm:$0xff]
        %v463 = vld [vmem:[%s2 + $0x18] sm:$0xff]
        %v464 = vld [vmem:[%s3] sm:$0xff]
        %v465 = vld [vmem:[%s3 + $0x8] sm:$0xff]
        %v466 = vld [vmem:[%s3 + $0x10] sm:$0xff]
        %v467 = vld [vmem:[%s3 + $0x18] sm:$0xff]
        %vm468 = vcmask 31744
        %v470 = vsel %vm468, %v456, 0
        %v473 = vsel %vm468, %v457, 0
        %v476 = vsel %vm468, %v458, 0
        %v479 = vsel %vm468, %v459, 0
        %vm481 = vcmask 1043456
        %v483 = vsel %vm481, %v453, 0
        %485 = vmatprep.subr.mxu0 0.0
        %486 = vmatpush1.msra.mxu0 %v483
        %487 = vmatprep.subr.mxu0 0.0
        %488 = vmatpush1.msra.mxu0 0.0
        %489 = vmatprep.subr.mxu0 0.0
        %490 = vmatpush1.msra.mxu0 0.0
        %491 = vmatprep.subr.mxu0 0.0
        %492 = vmatpush1.msra.mxu0 0.0
        %493 = vmatprep.subr.mxu0 0.0
        %494 = vmatpush1.msra.mxu0 0.0
        %495 = vmatprep.subr.mxu0 0.0
        %496 = vmatpush1.msra.mxu0 0.0
        %497 = vmatprep.subr.mxu0 0.0
        %498 = vmatpush1.msra.mxu0 0.0
        %499 = vmatprep.subr.mxu0 0.0
        %500 = vmatpush1.msra.mxu0 0.0
        %501 = vmatprep.subr.mxu0 0.0
        %502 = vmatpush1.msra.mxu0 0.0
        %503 = vmatprep.subr.mxu0 0.0
        %504 = vmatpush1.msra.mxu0 0.0
        %505 = vmatprep.subr.mxu0 0.0
        %506 = vmatpush1.msra.mxu0 0.0
        %507 = vmatprep.subr.mxu0 0.0
        %508 = vmatpush1.msra.mxu0 0.0
        %509 = vmatprep.subr.mxu0 0.0
        %510 = vmatpush1.msra.mxu0 0.0
        %511 = vmatprep.subr.mxu0 0.0
        %512 = vmatpush1.msra.mxu0 0.0
        %513 = vmatprep.subr.mxu0 0.0
        %514 = vmatpush1.msra.mxu0 0.0
        %515 = vmatprep.subr.mxu0 0.0
        %516 = vmatpush1.msra.mxu0 0.0
        %517 = vmatprep.subr.mxu0 0.0
        %518 = vmatpush1.msra.mxu0 0.0
        %519 = vmatprep.subr.mxu0 0.0
        %520 = vmatpush1.msra.mxu0 0.0
        %521 = vmatprep.subr.mxu0 0.0
        %522 = vmatpush1.msra.mxu0 0.0
        %523 = vmatprep.subr.mxu0 0.0
        %524 = vmatpush1.msra.mxu0 0.0
        %525 = vmatprep.subr.mxu0 0.0
        %526 = vmatpush1.msra.mxu0 0.0
        %527 = vmatprep.subr.mxu0 0.0
        %528 = vmatpush1.msra.mxu0 0.0
        %529 = vmatprep.subr.mxu0 0.0
        %530 = vmatpush1.msra.mxu0 0.0
        %531 = vmatprep.subr.mxu0 0.0
        %532 = vmatpush1.msra.mxu0 0.0
        %533 = vmatprep.subr.mxu0 0.0
        %534 = vmatpush1.msra.mxu0 0.0
        %535 = vmatprep.subr.mxu0 0.0
        %536 = vmatpush1.msra.mxu0 0.0
        %537 = vmatprep.subr.mxu0 0.0
        %538 = vmatpush1.msra.mxu0 0.0
        %539 = vmatprep.subr.mxu0 0.0
        %540 = vmatpush1.msra.mxu0 0.0
        %541 = vmatprep.subr.mxu0 0.0
        %542 = vmatpush1.msra.mxu0 0.0
        %543 = vmatprep.subr.mxu0 0.0
        %544 = vmatpush1.msra.mxu0 0.0
        %545 = vmatprep.subr.mxu0 0.0
        %546 = vmatpush1.msra.mxu0 0.0
        %547 = vmatprep.subr.mxu0 0.0
        %548 = vmatpush1.msra.mxu0 0.0
        %549 = vmatprep.mubr.f32.mxu0 0.0
        %550 = vmatmul.mubr.f32.gmra.mrb[0].mxu0 %v470
        %v551 = vpop.f32.mrb[0].mxu0
        %v552 = vadd.f32 %v460, %v551
        %v553 = vpop.f32.mrb[0].mxu0
        %554 = vmatprep.mubr.f32.mxu0 0.0
        %555 = vmatmul.mubr.f32.gmra.mrb[0].mxu0 %v473
        %v556 = vpop.f32.mrb[0].mxu0
        %v557 = vadd.f32 %v461, %v556
        %v558 = vpop.f32.mrb[0].mxu0
        %559 = vmatprep.mubr.f32.mxu0 0.0
        %560 = vmatmul.mubr.f32.gmra.mrb[0].mxu0 %v476
        %v561 = vpop.f32.mrb[0].mxu0
        %v562 = vadd.f32 %v462, %v561
        %v563 = vpop.f32.mrb[0].mxu0
        %564 = vmatprep.mubr.f32.mxu0 0.0
        %565 = vmatmul.mubr.f32.gmra.mrb[0].mxu0 %v479
        %v566 = vpop.f32.mrb[0].mxu0
        %v567 = vadd.f32 %v463, %v566
        %v568 = vpop.f32.mrb[0].mxu0
        %569 = vdwg.mxu0
        %v570 = vmax.f32 %v552, 0.0
        %v571 = vmax.f32 %v557, 0.0
        %v572 = vmax.f32 %v562, 0.0
        %v573 = vmax.f32 %v567, 0.0
        %v574 = vmul.f32 %v570, %v464
        %v575 = vmul.f32 %v571, %v465
        %v576 = vmul.f32 %v572, %v466
        %v577 = vmul.f32 %v573, %v467
        %v578 = vrot.slane %v453, 4
        %v579 = vsel %vm481, %v578, 0
        %581 = vmatprep.subr.mxu0 0.0
        %582 = vmatpush1.msra.mxu0 %v579
        %583 = vmatprep.subr.mxu0 0.0
        %584 = vmatpush1.msra.mxu0 0.0
        %585 = vmatprep.subr.mxu0 0.0
        %586 = vmatpush1.msra.mxu0 0.0
        %587 = vmatprep.subr.mxu0 0.0
        %588 = vmatpush1.msra.mxu0 0.0
        %589 = vmatprep.subr.mxu0 0.0
        %590 = vmatpush1.msra.mxu0 0.0
        %591 = vmatprep.subr.mxu0 0.0
        %592 = vmatpush1.msra.mxu0 0.0
        %593 = vmatprep.subr.mxu0 0.0
        %594 = vmatpush1.msra.mxu0 0.0
        %595 = vmatprep.subr.mxu0 0.0
        %596 = vmatpush1.msra.mxu0 0.0
        %597 = vmatprep.subr.mxu0 0.0
        %598 = vmatpush1.msra.mxu0 0.0
        %599 = vmatprep.subr.mxu0 0.0
        %600 = vmatpush1.msra.mxu0 0.0
        %601 = vmatprep.subr.mxu0 0.0
        %602 = vmatpush1.msra.mxu0 0.0
        %603 = vmatprep.subr.mxu0 0.0
        %604 = vmatpush1.msra.mxu0 0.0
        %605 = vmatprep.subr.mxu0 0.0
        %606 = vmatpush1.msra.mxu0 0.0
        %607 = vmatprep.subr.mxu0 0.0
        %608 = vmatpush1.msra.mxu0 0.0
        %609 = vmatprep.subr.mxu0 0.0
        %610 = vmatpush1.msra.mxu0 0.0
        %611 = vmatprep.subr.mxu0 0.0
        %612 = vmatpush1.msra.mxu0 0.0
        %613 = vmatprep.subr.mxu0 0.0
        %614 = vmatpush1.msra.mxu0 0.0
        %615 = vmatprep.subr.mxu0 0.0
        %616 = vmatpush1.msra.mxu0 0.0
        %617 = vmatprep.subr.mxu0 0.0
        %618 = vmatpush1.msra.mxu0 0.0
        %619 = vmatprep.subr.mxu0 0.0
        %620 = vmatpush1.msra.mxu0 0.0
        %621 = vmatprep.subr.mxu0 0.0
        %622 = vmatpush1.msra.mxu0 0.0
        %623 = vmatprep.subr.mxu0 0.0
        %624 = vmatpush1.msra.mxu0 0.0
        %625 = vmatprep.subr.mxu0 0.0
        %626 = vmatpush1.msra.mxu0 0.0
        %627 = vmatprep.subr.mxu0 0.0
        %628 = vmatpush1.msra.mxu0 0.0
        %629 = vmatprep.subr.mxu0 0.0
        %630 = vmatpush1.msra.mxu0 0.0
        %631 = vmatprep.subr.mxu0 0.0
        %632 = vmatpush1.msra.mxu0 0.0
        %633 = vmatprep.subr.mxu0 0.0
        %634 = vmatpush1.msra.mxu0 0.0
        %635 = vmatprep.subr.mxu0 0.0
        %636 = vmatpush1.msra.mxu0 0.0
        %637 = vmatprep.subr.mxu0 0.0
        %638 = vmatpush1.msra.mxu0 0.0
        %639 = vmatprep.subr.mxu0 0.0
        %640 = vmatpush1.msra.mxu0 0.0
        %641 = vmatprep.subr.mxu0 0.0
        %642 = vmatpush1.msra.mxu0 0.0
        %643 = vmatprep.subr.mxu0 0.0
        %644 = vmatpush1.msra.mxu0 0.0
        %645 = vmatprep.mubr.f32.mxu0 0.0
        %646 = vmatmul.mubr.f32.gmra.mrb[0].mxu0 %v470
        %v647 = vpop.f32.mrb[0].mxu0
        %v648 = vadd.f32 %v460, %v647
        %v649 = vpop.f32.mrb[0].mxu0
        %650 = vmatprep.mubr.f32.mxu0 0.0
        %651 = vmatmul.mubr.f32.gmra.mrb[0].mxu0 %v473
        %v652 = vpop.f32.mrb[0].mxu0
        %v653 = vadd.f32 %v461, %v652
        %v654 = vpop.f32.mrb[0].mxu0
        %655 = vmatprep.mubr.f32.mxu0 0.0
        %656 = vmatmul.mubr.f32.gmra.mrb[0].mxu0 %v476
        %v657 = vpop.f32.mrb[0].mxu0
        %v658 = vadd.f32 %v462, %v657
        %v659 = vpop.f32.mrb[0].mxu0
        %660 = vmatprep.mubr.f32.mxu0 0.0
        %661 = vmatmul.mubr.f32.gmra.mrb[0].mxu0 %v479
        %v662 = vpop.f32.mrb[0].mxu0
        %v663 = vadd.f32 %v463, %v662
        %v664 = vpop.f32.mrb[0].mxu0
        %665 = vdwg.mxu0
        %v666 = vmax.f32 %v648, 0.0
        %v667 = vmax.f32 %v653, 0.0
        %v668 = vmax.f32 %v658, 0.0
        %v669 = vmax.f32 %v663, 0.0
        %v670 = vmul.f32 %v666, %v464
        %v671 = vmul.f32 %v667, %v465
        %v672 = vmul.f32 %v668, %v466
        %v673 = vmul.f32 %v669, %v467
        %v674 = vld [vmem:[%s316] sm:$0xff]
        %v675 = vld [vmem:[%s316 + $0x8] sm:$0xff]
        %v676 = vld [vmem:[%s316 + $0x10] sm:$0xff]
        %v677 = vld [vmem:[%s316 + $0x18] sm:$0xff]
        %v678 = vld [vmem:[%s316 + $0x20] sm:$0xff]
        %v679 = vld [vmem:[%s316 + $0x28] sm:$0xff]
        %v680 = vld [vmem:[%s316 + $0x30] sm:$0xff]
        %v681 = vld [vmem:[%s316 + $0x38] sm:$0xff]
        %vm682 = vcmask 523264
        %v684 = vsel %vm682, %v574, 0
        %v687 = vsel %vm682, %v575, 0
        %v690 = vsel %vm682, %v576, 0
        %v693 = vsel %vm682, %v577, 0
        %v696 = vsel %vm682, %v670, 0
        %v699 = vsel %vm682, %v671, 0
        %v702 = vsel %vm682, %v672, 0
        %v705 = vsel %vm682, %v673, 0
        %707 = vmatprep.subr.mxu0 0.0
        %708 = vmatpush1.msra.mxu0 %v674
        %709 = vmatprep.subr.mxu0 0.0
        %710 = vmatpush1.msra.mxu0 %v675
        %711 = vmatprep.subr.mxu0 0.0
        %712 = vmatpush1.msra.mxu0 %v676
        %713 = vmatprep.subr.mxu0 0.0
        %714 = vmatpush1.msra.mxu0 %v677
        %715 = vmatprep.subr.mxu0 0.0
        %716 = vmatpush1.msra.mxu0 %v678
        %717 = vmatprep.subr.mxu0 0.0
        %718 = vmatpush1.msra.mxu0 %v679
        %719 = vmatprep.subr.mxu0 0.0
        %720 = vmatpush1.msra.mxu0 %v680
        %721 = vmatprep.subr.mxu0 0.0
        %722 = vmatpush1.msra.mxu0 %v681
        %723 = vmatprep.subr.mxu0 0.0
        %724 = vmatpush1.msra.mxu0 0.0
        %725 = vmatprep.subr.mxu0 0.0
        %726 = vmatpush1.msra.mxu0 0.0
        %727 = vmatprep.subr.mxu0 0.0
        %728 = vmatpush1.msra.mxu0 0.0
        %729 = vmatprep.subr.mxu0 0.0
        %730 = vmatpush1.msra.mxu0 0.0
        %731 = vmatprep.subr.mxu0 0.0
        %732 = vmatpush1.msra.mxu0 0.0
        %733 = vmatprep.subr.mxu0 0.0
        %734 = vmatpush1.msra.mxu0 0.0
        %735 = vmatprep.subr.mxu0 0.0
        %736 = vmatpush1.msra.mxu0 0.0
        %737 = vmatprep.subr.mxu0 0.0
        %738 = vmatpush1.msra.mxu0 0.0
        %739 = vmatprep.subr.mxu0 0.0
        %740 = vmatpush1.msra.mxu0 0.0
        %741 = vmatprep.subr.mxu0 0.0
        %742 = vmatpush1.msra.mxu0 0.0
        %743 = vmatprep.subr.mxu0 0.0
        %744 = vmatpush1.msra.mxu0 0.0
        %745 = vmatprep.subr.mxu0 0.0
        %746 = vmatpush1.msra.mxu0 0.0
        %747 = vmatprep.subr.mxu0 0.0
        %748 = vmatpush1.msra.mxu0 0.0
        %749 = vmatprep.subr.mxu0 0.0
        %750 = vmatpush1.msra.mxu0 0.0
        %751 = vmatprep.subr.mxu0 0.0
        %752 = vmatpush1.msra.mxu0 0.0
        %753 = vmatprep.subr.mxu0 0.0
        %754 = vmatpush1.msra.mxu0 0.0
        %755 = vmatprep.subr.mxu0 0.0
        %756 = vmatpush1.msra.mxu0 0.0
        %757 = vmatprep.subr.mxu0 0.0
        %758 = vmatpush1.msra.mxu0 0.0
        %759 = vmatprep.subr.mxu0 0.0
        %760 = vmatpush1.msra.mxu0 0.0
        %761 = vmatprep.subr.mxu0 0.0
        %762 = vmatpush1.msra.mxu0 0.0
        %763 = vmatprep.subr.mxu0 0.0
        %764 = vmatpush1.msra.mxu0 0.0
        %765 = vmatprep.subr.mxu0 0.0
        %766 = vmatpush1.msra.mxu0 0.0
        %767 = vmatprep.subr.mxu0 0.0
        %768 = vmatpush1.msra.mxu0 0.0
        %769 = vmatprep.subr.mxu0 0.0
        %770 = vmatpush1.msra.mxu0 0.0
        %771 = vmatprep.mubr.f32.mxu0 0.0
        %772 = vmatmul.mubr.f32.gmra.mrb[0].mxu0 %v684
        %v773 = vpop.f32.mrb[0].mxu0
        %v774 = vadd.f32 0.0, %v773
        %v775 = vpop.f32.mrb[0].mxu0
        %776 = vmatprep.mubr.f32.mxu0 0.0
        %777 = vmatmul.mubr.f32.gmra.mrb[0].mxu0 %v687
        %v778 = vpop.f32.mrb[0].mxu0
        %v779 = vadd.f32 0.0, %v778
        %v780 = vpop.f32.mrb[0].mxu0
        %781 = vmatprep.mubr.f32.mxu0 0.0
        %782 = vmatmul.mubr.f32.gmra.mrb[0].mxu0 %v690
        %v783 = vpop.f32.mrb[0].mxu0
        %v784 = vadd.f32 0.0, %v783
        %v785 = vpop.f32.mrb[0].mxu0
        %786 = vmatprep.mubr.f32.mxu0 0.0
        %787 = vmatmul.mubr.f32.gmra.mrb[0].mxu0 %v693
        %v788 = vpop.f32.mrb[0].mxu0
        %v789 = vadd.f32 0.0, %v788
        %v790 = vpop.f32.mrb[0].mxu0
        %791 = vmatprep.mubr.f32.mxu0 0.0
        %792 = vmatmul.mubr.f32.gmra.mrb[0].mxu0 %v696
        %v793 = vpop.f32.mrb[0].mxu0
        %v794 = vadd.f32 0.0, %v793
        %v795 = vpop.f32.mrb[0].mxu0
        %796 = vmatprep.mubr.f32.mxu0 0.0
        %797 = vmatmul.mubr.f32.gmra.mrb[0].mxu0 %v699
        %v798 = vpop.f32.mrb[0].mxu0
        %v799 = vadd.f32 0.0, %v798
        %v800 = vpop.f32.mrb[0].mxu0
        %801 = vmatprep.mubr.f32.mxu0 0.0
        %802 = vmatmul.mubr.f32.gmra.mrb[0].mxu0 %v702
        %v803 = vpop.f32.mrb[0].mxu0
        %v804 = vadd.f32 0.0, %v803
        %v805 = vpop.f32.mrb[0].mxu0
        %806 = vmatprep.mubr.f32.mxu0 0.0
        %807 = vmatmul.mubr.f32.gmra.mrb[0].mxu0 %v705
        %v808 = vpop.f32.mrb[0].mxu0
        %v809 = vadd.f32 0.0, %v808
        %v810 = vpop.f32.mrb[0].mxu0
        %811 = vdwg.mxu0
        %812 = vst [vmem:[%s347 + $0x4] sm:$0xff] %v774
        %813 = vst [vmem:[%s347 + $0xc] sm:$0xff] %v779
        %814 = vst [vmem:[%s347 + $0x14] sm:$0xff] %v784
        %815 = vst [vmem:[%s347 + $0x1c] sm:$0xff] %v789
        %v816 = vld [vmem:[%s351] sm:$0xf]
        %817 = vst [vmem:[%s347] sm:$0xf] %v816
        %s818 = scalar_lea.vmem %s347, 40 [#allocation3]
        %819 = vst [vmem:[%s818 + $0x4] sm:$0xff] %v794
        %820 = vst [vmem:[%s818 + $0xc] sm:$0xff] %v799
        %821 = vst [vmem:[%s818 + $0x14] sm:$0xff] %v804
        %822 = vst [vmem:[%s818 + $0x1c] sm:$0xff] %v809
        %v823 = vld [vmem:[%s351 + $0x4] sm:$0xf]
        %824 = vst [vmem:[%s818] sm:$0xf] %v823
        %s825 = sand.u32 %s183, 1
        %s826 = sand.u32 %s183, 1
        %s827 = smul.addr %s826, 80
        %s828 = scalar_lea.vmem [#allocation3], %s827
        // Predicated region
        $region87: #{pyramid_pooling_module.1} parent=81 // pred_check
          %p829 = pneg %p193
        $region88: #{pyramid_pooling_module.1} parent=81 // pred_check_branch
          %831 = sbr.rel (%p829) target = $region90
        $region89: #{pyramid_pooling_module.1} parent=81 // pred_region
          %s832 = smul.addr %s18, 8
          %s833 = scalar_lea.vmem %s7, %s832
          // Predicated region
          $region91: #{pyramid_pooling_module.1} parent=89 // pred_check
            _
          $region92: #{pyramid_pooling_module.1} parent=89 // pred_check_branch
            %835 = sbr.rel (0) target = $region94
          $region93: #{pyramid_pooling_module.1} parent=89 // pred_region
            // Predicated region
            $region95: #{pyramid_pooling_module.1} parent=93 // pred_check
              _
            $region96: #{pyramid_pooling_module.1} parent=93 // pred_check_branch
              %837 = sbr.rel (0) target = $region98
            $region97: #{pyramid_pooling_module.1} parent=93 // pred_region
              // Predicated region
              $region110: #{pyramid_pooling_module.1} parent=97 // pred_check
                _
              $region111: #{pyramid_pooling_module.1} parent=97 // pred_check_branch
                %870 = sbr.rel (0) target = $region113
              $region112: #{pyramid_pooling_module.1} parent=97 // pred_region
                loop: start=0, step=1, limit=1
                $region114: #{pyramid_pooling_module.1} parent=112 // loop_pre_header
                  _
                $region115: #{pyramid_pooling_module.1} parent=112 // loop_header
                  %s872 = sphi 0, %s876
                  %p873 = scmp.ge.s32.totalorder %s872, 1
                  %s877 = sphi %s828, %s828
                  %s878 = sphi %s833, %s833
                $region116: #{pyramid_pooling_module.1} parent=112 // loop_header_branch
                  %875 = sbr.rel (%p873) target = $region120
                $region117: #{pyramid_pooling_module.1} parent=112 // loop_body
                  %v879 = vld [vmem:[%s877] sm:$0xff]
                  %880 = vst [vmem:[%s878] sm:$0xff] %v879
                  %v881 = vld [vmem:[%s877 + $0x8] sm:$0xff]
                  %882 = vst [vmem:[%s878 + $0x10] sm:$0xff] %v881
                  %v883 = vld [vmem:[%s877 + $0x10] sm:$0xff]
                  %884 = vst [vmem:[%s878 + $0x20] sm:$0xff] %v883
                  %v885 = vld [vmem:[%s877 + $0x18] sm:$0xff]
                  %886 = vst [vmem:[%s878 + $0x30] sm:$0xff] %v885
                  %v887 = vld [vmem:[%s877 + $0x20] sm:$0xff]
                  %888 = vst [vmem:[%s878 + $0x40] sm:$0xff] %v887
                  %v889 = vld [vmem:[%s877 + $0x28] sm:$0xff]
                  %890 = vst [vmem:[%s878 + $0x50] sm:$0xff] %v889
                  %v891 = vld [vmem:[%s877 + $0x30] sm:$0xff]
                  %892 = vst [vmem:[%s878 + $0x60] sm:$0xff] %v891
                  %v893 = vld [vmem:[%s877 + $0x38] sm:$0xff]
                  %894 = vst [vmem:[%s878 + $0x70] sm:$0xff] %v893
                  %v895 = vld [vmem:[%s877 + $0x40] sm:$0xff]
                  %896 = vst [vmem:[%s878 + $0x80] sm:$0xff] %v895
                  %v897 = vld [vmem:[%s877 + $0x48] sm:$0xff]
                  %898 = vst [vmem:[%s878 + $0x90] sm:$0xff] %v897
                $region118: #{pyramid_pooling_module.1} parent=112 // loop_footer
                  %s876 = sadd.s32 1, %s872
                $region119: #{pyramid_pooling_module.1} parent=112 // loop_footer_branch
                  %871 = sbr.rel target = $region115
                $region120: #{pyramid_pooling_module.1} parent=112 // loop_exit
                  _
              $region113: #{pyramid_pooling_module.1} parent=97 // pred_fallthru
                _
              // Predicated region
              $region121: #{pyramid_pooling_module.1} parent=97 // pred_check
                _
              $region122: #{pyramid_pooling_module.1} parent=97 // pred_check_branch
                %900 = sbr.rel target = $region124
              $region123: #{pyramid_pooling_module.1} parent=97 // pred_region
                _
              $region124: #{pyramid_pooling_module.1} parent=97 // pred_fallthru
                _
            $region98: #{pyramid_pooling_module.1} parent=93 // pred_fallthru
              _
            // Predicated region
            $region99: #{pyramid_pooling_module.1} parent=93 // pred_check
              _
            $region100: #{pyramid_pooling_module.1} parent=93 // pred_check_branch
              %839 = sbr.rel target = $region102
            $region101: #{pyramid_pooling_module.1} parent=93 // pred_region
              loop: start=0, step=1, limit=1
              $region103: #{pyramid_pooling_module.1} parent=101 // loop_pre_header
                _
              $region104: #{pyramid_pooling_module.1} parent=101 // loop_header
                %s842 = sphi 0, %s846
                %p843 = scmp.ge.s32.totalorder %s842, 1
                %s847 = sphi %s828, %s828
                %s848 = sphi %s833, %s833
              $region105: #{pyramid_pooling_module.1} parent=101 // loop_header_branch
                %845 = sbr.rel (%p843) target = $region109
              $region106: #{pyramid_pooling_module.1} parent=101 // loop_body
                %v849 = vld [vmem:[%s847] sm:$0xff]
                %850 = vst [vmem:[%s848] sm:$0xff] %v849
                %v851 = vld [vmem:[%s847 + $0x8] sm:$0xff]
                %852 = vst [vmem:[%s848 + $0x10] sm:$0xff] %v851
                %v853 = vld [vmem:[%s847 + $0x10] sm:$0xff]
                %854 = vst [vmem:[%s848 + $0x20] sm:$0xff] %v853
                %v855 = vld [vmem:[%s847 + $0x18] sm:$0xff]
                %856 = vst [vmem:[%s848 + $0x30] sm:$0xff] %v855
                %v857 = vld [vmem:[%s847 + $0x20] sm:$0xff]
                %858 = vst [vmem:[%s848 + $0x40] sm:$0xff] %v857
                %v859 = vld [vmem:[%s847 + $0x28] sm:$0xff]
                %860 = vst [vmem:[%s848 + $0x50] sm:$0xff] %v859
                %v861 = vld [vmem:[%s847 + $0x30] sm:$0xff]
                %862 = vst [vmem:[%s848 + $0x60] sm:$0xff] %v861
                %v863 = vld [vmem:[%s847 + $0x38] sm:$0xff]
                %864 = vst [vmem:[%s848 + $0x70] sm:$0xff] %v863
                %v865 = vld [vmem:[%s847 + $0x40] sm:$0xff]
                %866 = vst [vmem:[%s848 + $0x80] sm:$0xff] %v865
                %v867 = vld [vmem:[%s847 + $0x48] sm:$0xff]
                %868 = vst [vmem:[%s848 + $0x90] sm:$0xff] %v867
              $region107: #{pyramid_pooling_module.1} parent=101 // loop_footer
                %s846 = sadd.s32 1, %s842
              $region108: #{pyramid_pooling_module.1} parent=101 // loop_footer_branch
                %841 = sbr.rel target = $region104
              $region109: #{pyramid_pooling_module.1} parent=101 // loop_exit
                _
            $region102: #{pyramid_pooling_module.1} parent=93 // pred_fallthru
              _
          $region94: #{pyramid_pooling_module.1} parent=89 // pred_fallthru
            _
          %901 = vnop
        $region90: #{pyramid_pooling_module.1} parent=81 // pred_fallthru
          _
      $region82: #{pyramid_pooling_module.1} parent=5 // pred_fallthru
        _
      %p902 = scmp.le.s32.totalorder 2, %s13
      // Predicated region
      $region125: #{pyramid_pooling_module.1} parent=5 // pred_check
        %p903 = pneg %p902
      $region126: #{pyramid_pooling_module.1} parent=5 // pred_check_branch
        %905 = sbr.rel (%p903) target = $region128
      $region127: #{pyramid_pooling_module.1} parent=5 // pred_region
        %s906 = ssub.s32 %s13, 2
        // Predicated region
        $region129: #{pyramid_pooling_module.1} parent=127 // pred_check
          %p907 = pneg %p199
        $region130: #{pyramid_pooling_module.1} parent=127 // pred_check_branch
          %909 = sbr.rel (%p907) target = $region132
        $region131: #{pyramid_pooling_module.1} parent=127 // pred_region
          %s910 = sand.u32 %s184, 1
          %s911 = sand.u32 %s184, 1
          %s912 = smul.addr %s911, 80
          %s913 = scalar_lea.vmem [#allocation3], %s912
        $region132: #{pyramid_pooling_module.1} parent=127 // pred_fallthru
          _
      $region128: #{pyramid_pooling_module.1} parent=5 // pred_fallthru
        _
    $region6: #{pyramid_pooling_module.1} parent=1 // loop_footer
      %s17 = sadd.s32 1, %s13
    $region7: #{pyramid_pooling_module.1} parent=1 // loop_footer_branch
      %12 = sbr.rel target = $region3
    $region8: #{pyramid_pooling_module.1} parent=1 // loop_exit
      _

</llo_original>
